<compile_context>
chip_gen: v7x
topology: tpu7x:2x2x1
jax: 0.10.0
libtpu: 0.0.40
codegen_flags: <defaults>
</compile_context>

<pallas_src>
import numpy as np
import jax
import jax.numpy as jnp
from jax import lax
from jax.experimental import pallas as pl
from jax.experimental.pallas import tpu as pltpu


def _ssim_kernel(zs_row_ref, zsT_ref, zt_row_ref, ztT_ref, mask_ref, out_ref):
    """One row-tile of the gram matrices: masked log-softmax rows + KL partial sum."""
    # Gram-matrix row tiles on the MXU: [TM, D] x [D, N] -> [TM, N] (standard M,K x K,N).
    dn = (((1,), (0,)), ((), ()))
    s_s = lax.dot_general(zs_row_ref[...], zsT_ref[...], dn,
                          preferred_element_type=jnp.float32)  # [TM, N]
    s_t = lax.dot_general(zt_row_ref[...], ztT_ref[...], dn,
                          preferred_element_type=jnp.float32)  # [TM, N]

    mask = mask_ref[...] != 0
    neg = jnp.float32(-1e30)

    def masked_log_softmax_parts(x):
        xm = jnp.where(mask, x, neg)
        m = jnp.max(xm, axis=-1, keepdims=True)
        ex = jnp.exp(xm - m)                      # masked entries underflow to exactly 0
        s = jnp.sum(ex, axis=-1, keepdims=True)
        c = m + jnp.log(s)                        # per-row constant, single subtract below
        return xm - c, ex, s

    ls_s, _, _ = masked_log_softmax_parts(s_s)
    ls_t, ex_t, sum_t = masked_log_softmax_parts(s_t)

    # p_t = softmax(s_t): reuse the numerator, approx reciprocal runs on the EUP slot.
    p_t = ex_t * pl.reciprocal(sum_t, approx=True)

    # F.kl_div(ls_s, ls_t, log_target=True) pointwise = exp(ls_t) * (ls_t - ls_s)
    kl = jnp.where(mask, p_t * (ls_t - ls_s), 0.0)

    tm, n = kl.shape
    # Sublane-group reduce (free reshape + VPU adds), then fold N lanes down to 128.
    part = jnp.sum(kl.reshape(tm // 8, 8, n), axis=0)            # [8, N]
    part = jnp.sum(part.reshape(8, n // 128, 128), axis=1)       # [8, 128]
    out_ref[...] = part.reshape(1, 8, 128)


def structural_similarity_sum(z_s, z_t, mask_i8, *, tm=128):
    """Returns sum over edges of exp(ls_t)*(ls_t - ls_s) (scalar)."""
    n, d_s = z_s.shape
    n2, d_t = z_t.shape
    assert n == n2 and mask_i8.shape == (n, n)
    assert n % 128 == 0, "N must be a multiple of 128 for the lane-dense reduction"
    tm = min(tm, n)
    assert n % tm == 0 and tm % 8 == 0
    grid = (n // tm,)

    # One-time XLA transposes -> MXU-native [K, N] RHS layout (no in-kernel relayout).
    zsT = z_s.T
    ztT = z_t.T

    # VMEM estimate: resident z^T + double-buffered row/mask tiles + f32 [TM, N] temporaries.
    est = ((d_s + d_t) * n * 4
           + 2 * tm * (d_s + d_t) * 4
           + 2 * tm * n * 1
           + 8 * tm * n * 4
           + 4 * 8 * 128 * 4)
    vmem_limit = int(max(32 * 1024 * 1024, min(2 * est, 64 * 1024 * 1024)))

    parts = pl.pallas_call(
        _ssim_kernel,
        out_shape=jax.ShapeDtypeStruct((n // tm, 8, 128), jnp.float32),
        grid_spec=pltpu.PrefetchScalarGridSpec(
            num_scalar_prefetch=0,
            grid=grid,
            in_specs=[
                pl.BlockSpec((tm, d_s), lambda i: (i, 0)),  # student row tile (LHS)
                pl.BlockSpec((d_s, n), lambda i: (0, 0)),   # student z^T (resident RHS)
                pl.BlockSpec((tm, d_t), lambda i: (i, 0)),  # teacher row tile (LHS)
                pl.BlockSpec((d_t, n), lambda i: (0, 0)),   # teacher z^T (resident RHS)
                pl.BlockSpec((tm, n), lambda i: (i, 0)),    # int8 edge-mask tile
            ],
            out_specs=pl.BlockSpec((1, 8, 128), lambda i: (i, 0, 0)),
        ),
        compiler_params=pltpu.CompilerParams(
            dimension_semantics=("parallel",),
            vmem_limit_bytes=vmem_limit),
    )(z_s, zsT, z_t, ztT, mask_i8)

    return jnp.sum(parts)


def structural_similarity_loss(z_s, z_t, e_s, e_t, same_ei=False):
    """Full forward: unique edge set (host glue) + on-device int8 mask + Pallas hot path."""
    n = z_s.shape[0]
    if same_ei:
        e_u = np.asarray(e_t)
    else:
        cat = np.concatenate([np.asarray(e_s), np.asarray(e_t)], axis=1)
        e_u = np.unique(cat, axis=1)  # unique columns, like torch.unique(dim=1)

    # Dense int8 adjacency built on-device (4x smaller HBM stream than f32).
    src = jnp.asarray(e_u[0], dtype=jnp.int32)
    dst = jnp.asarray(e_u[1], dtype=jnp.int32)
    mask_i8 = jnp.zeros((n, n), dtype=jnp.int8).at[src, dst].set(jnp.int8(1))

    # scatter_sum output length = max(index)+1; zero rows still count in .mean()
    denom = float(int(e_u[0].max()) + 1)

    total = structural_similarity_sum(z_s, z_t, mask_i8)
    return total / denom


def _reference_loss(z_s, z_t, mask_i8, denom):
    """Pure-JAX reference for validation."""
    m = mask_i8 != 0
    neg = jnp.float32(-1e30)

    def ls(x):
        return jax.nn.log_softmax(jnp.where(m, x, neg), axis=-1)

    ls_s = ls(z_s @ z_s.T)
    ls_t = ls(z_t @ z_t.T)
    kl = jnp.where(m, jnp.exp(ls_t) * (ls_t - ls_s), 0.0)
    return jnp.sum(kl) / denom


if __name__ == "__main__":
    key = jax.random.PRNGKey(0)
    k1, k2, k3, k4 = jax.random.split(key, 4)

    N, D_S, D_T = 128, 32, 64
    E_S, E_T = 256, 256

    z_s = jax.random.normal(k1, (N, D_S), dtype=jnp.float32)
    z_t = jax.random.normal(k2, (N, D_T), dtype=jnp.float32)
    e_s = jax.random.randint(k3, (2, E_S), 0, N, dtype=jnp.int32)
    e_t = jax.random.randint(k4, (2, E_T), 0, N, dtype=jnp.int32)

    loss = structural_similarity_loss(z_s, z_t, e_s, e_t, same_ei=False)
    loss = jax.block_until_ready(loss)

    assert bool(jnp.isfinite(loss)), f"non-finite loss: {loss}"

    # Validate against a pure-JAX reference (approx reciprocal -> loose tolerance).
    cat = np.concatenate([np.asarray(e_s), np.asarray(e_t)], axis=1)
    e_u = np.unique(cat, axis=1)
    mask_i8 = jnp.zeros((N, N), dtype=jnp.int8).at[
        jnp.asarray(e_u[0]), jnp.asarray(e_u[1])].set(jnp.int8(1))
    ref = _reference_loss(z_s, z_t, mask_i8, float(int(e_u[0].max()) + 1))
    ref = jax.block_until_ready(ref)
    np.testing.assert_allclose(np.asarray(loss), np.asarray(ref), rtol=2e-2, atol=1e-3)

    print("KERNEL_OK")
</pallas_src>

<mosaic_0001>
module attributes {stable_mosaic.version = 11 : i64} {
  func.func @_ssim_kernel(%arg0: i32, %arg1: memref<128x32xf32, #tpu.memory_space<vmem>>, %arg2: memref<32x128xf32, #tpu.memory_space<vmem>>, %arg3: memref<128x64xf32, #tpu.memory_space<vmem>>, %arg4: memref<64x128xf32, #tpu.memory_space<vmem>>, %arg5: memref<128x128xi8, #tpu.memory_space<vmem>>, %arg6: memref<1x8x128xf32, #tpu.memory_space<vmem>>) attributes {dimension_semantics = [#tpu.dimension_semantics<parallel>], iteration_bounds = array<i64: 1>, scalar_prefetch = 0 : i64, scratch_operands = 0 : i64, tpu.core_type = #tpu.core_type<tc>, window_params = [{transform_indices = @transform_0, window_bounds = array<i64: 128, 32>}, {pipeline_mode = #tpu.pipeline_mode<synchronous>, transform_indices = @transform_1, window_bounds = array<i64: 32, 128>}, {transform_indices = @transform_2, window_bounds = array<i64: 128, 64>}, {pipeline_mode = #tpu.pipeline_mode<synchronous>, transform_indices = @transform_3, window_bounds = array<i64: 64, 128>}, {transform_indices = @transform_4, window_bounds = array<i64: 128, 128>}, {transform_indices = @transform_5, window_bounds = array<i64: 1, 8, 128>}]} {
    %c0 = arith.constant 0 : index
    %c0_0 = arith.constant 0 : index
    %0 = vector.load %arg1[%c0, %c0_0] : memref<128x32xf32, #tpu.memory_space<vmem>>, vector<128x32xf32>
    %c0_1 = arith.constant 0 : index
    %c0_2 = arith.constant 0 : index
    %1 = vector.load %arg2[%c0_1, %c0_2] : memref<32x128xf32, #tpu.memory_space<vmem>>, vector<32x128xf32>
    %cst = arith.constant dense<0.000000e+00> : vector<128x128xf32>
    %2 = tpu.matmul %0, %1, %cst {dimension_numbers = #tpu.dot_dimension_numbers<[1], [0], [0], [1], [0, 0, 1, 1], [], []>} : vector<128x32xf32>, vector<32x128xf32>, vector<128x128xf32> -> vector<128x128xf32>
    %c0_3 = arith.constant 0 : index
    %c0_4 = arith.constant 0 : index
    %3 = vector.load %arg3[%c0_3, %c0_4] : memref<128x64xf32, #tpu.memory_space<vmem>>, vector<128x64xf32>
    %c0_5 = arith.constant 0 : index
    %c0_6 = arith.constant 0 : index
    %4 = vector.load %arg4[%c0_5, %c0_6] : memref<64x128xf32, #tpu.memory_space<vmem>>, vector<64x128xf32>
    %cst_7 = arith.constant dense<0.000000e+00> : vector<128x128xf32>
    %5 = tpu.matmul %3, %4, %cst_7 {dimension_numbers = #tpu.dot_dimension_numbers<[1], [0], [0], [1], [0, 0, 1, 1], [], []>} : vector<128x64xf32>, vector<64x128xf32>, vector<128x128xf32> -> vector<128x128xf32>
    %c0_8 = arith.constant 0 : index
    %c0_9 = arith.constant 0 : index
    %6 = vector.load %arg5[%c0_8, %c0_9] : memref<128x128xi8, #tpu.memory_space<vmem>>, vector<128x128xi8>
    %c0_i8 = arith.constant 0 : i8
    %7 = vector.broadcast %c0_i8 : i8 to vector<128x128xi8>
    %8 = arith.cmpi ne, %6, %7 : vector<128x128xi8>
    %cst_10 = arith.constant -1.000000e+30 : f32
    %9 = vector.broadcast %cst_10 : f32 to vector<128x128xf32>
    %10 = arith.select %8, %2, %9 : vector<128x128xi1>, vector<128x128xf32>
    %cst_11 = arith.constant dense<0xFF800000> : vector<128xf32>
    %11 = vector.multi_reduction <maximumf>, %10, %cst_11 [1] : vector<128x128xf32> to vector<128xf32>
    %12 = vector.shape_cast %11 : vector<128xf32> to vector<128x1xf32>
    %13 = vector.broadcast %12 : vector<128x1xf32> to vector<128x128xf32>
    %14 = arith.subf %10, %13 : vector<128x128xf32>
    %15 = math.exp %14 : vector<128x128xf32>
    %cst_12 = arith.constant dense<0.000000e+00> : vector<128xf32>
    %16 = vector.multi_reduction <add>, %15, %cst_12 [1] : vector<128x128xf32> to vector<128xf32>
    %17 = vector.shape_cast %16 : vector<128xf32> to vector<128x1xf32>
    %18 = math.log %17 : vector<128x1xf32>
    %19 = arith.addf %12, %18 : vector<128x1xf32>
    %20 = vector.broadcast %19 : vector<128x1xf32> to vector<128x128xf32>
    %21 = arith.subf %10, %20 : vector<128x128xf32>
    %cst_13 = arith.constant -1.000000e+30 : f32
    %22 = vector.broadcast %cst_13 : f32 to vector<128x128xf32>
    %23 = arith.select %8, %5, %22 : vector<128x128xi1>, vector<128x128xf32>
    %cst_14 = arith.constant dense<0xFF800000> : vector<128xf32>
    %24 = vector.multi_reduction <maximumf>, %23, %cst_14 [1] : vector<128x128xf32> to vector<128xf32>
    %25 = vector.shape_cast %24 : vector<128xf32> to vector<128x1xf32>
    %26 = vector.broadcast %25 : vector<128x1xf32> to vector<128x128xf32>
    %27 = arith.subf %23, %26 : vector<128x128xf32>
    %28 = math.exp %27 : vector<128x128xf32>
    %cst_15 = arith.constant dense<0.000000e+00> : vector<128xf32>
    %29 = vector.multi_reduction <add>, %28, %cst_15 [1] : vector<128x128xf32> to vector<128xf32>
    %30 = vector.shape_cast %29 : vector<128xf32> to vector<128x1xf32>
    %31 = math.log %30 : vector<128x1xf32>
    %32 = arith.addf %25, %31 : vector<128x1xf32>
    %33 = vector.broadcast %32 : vector<128x1xf32> to vector<128x128xf32>
    %34 = arith.subf %23, %33 : vector<128x128xf32>
    %35 = tpu.reciprocal %30 {approx = true} : vector<128x1xf32> -> vector<128x1xf32>
    %36 = vector.broadcast %35 : vector<128x1xf32> to vector<128x128xf32>
    %37 = arith.mulf %28, %36 : vector<128x128xf32>
    %38 = arith.subf %34, %21 : vector<128x128xf32>
    %39 = arith.mulf %37, %38 : vector<128x128xf32>
    %cst_16 = arith.constant 0.000000e+00 : f32
    %40 = vector.broadcast %cst_16 : f32 to vector<128x128xf32>
    %41 = arith.select %8, %39, %40 : vector<128x128xi1>, vector<128x128xf32>
    %42 = vector.shape_cast %41 : vector<128x128xf32> to vector<16x8x128xf32>
    %cst_17 = arith.constant dense<0.000000e+00> : vector<8x128xf32>
    %43 = vector.multi_reduction <add>, %42, %cst_17 [0] : vector<16x8x128xf32> to vector<8x128xf32>
    %44 = vector.shape_cast %43 : vector<8x128xf32> to vector<8x1x128xf32>
    %cst_18 = arith.constant dense<0.000000e+00> : vector<8x128xf32>
    %45 = vector.multi_reduction <add>, %44, %cst_18 [1] : vector<8x1x128xf32> to vector<8x128xf32>
    %46 = vector.shape_cast %45 : vector<8x128xf32> to vector<1x8x128xf32>
    %c0_19 = arith.constant 0 : index
    %c0_20 = arith.constant 0 : index
    %c0_21 = arith.constant 0 : index
    %47 = vector.load %arg6[%c0_19, %c0_20, %c0_21] : memref<1x8x128xf32, #tpu.memory_space<vmem>>, vector<1x8x128xf32>
    tpu.vector_store %arg6[%c0_19, %c0_20, %c0_21], %46 {strides = array<i32>} : memref<1x8x128xf32, #tpu.memory_space<vmem>>, vector<1x8x128xf32>,
    return
  }
  func.func @transform_0(%arg0: i32) -> (i32, i32) {
    %c0_i32 = arith.constant 0 : i32
    %c0_i32_0 = arith.constant 0 : i32
    return %arg0, %c0_i32 : i32, i32
  }
  func.func @transform_1(%arg0: i32) -> (i32, i32) {
    %c0_i32 = arith.constant 0 : i32
    %c0_i32_0 = arith.constant 0 : i32
    %c0_i32_1 = arith.constant 0 : i32
    return %c0_i32, %c0_i32_0 : i32, i32
  }
  func.func @transform_2(%arg0: i32) -> (i32, i32) {
    %c0_i32 = arith.constant 0 : i32
    %c0_i32_0 = arith.constant 0 : i32
    return %arg0, %c0_i32 : i32, i32
  }
  func.func @transform_3(%arg0: i32) -> (i32, i32) {
    %c0_i32 = arith.constant 0 : i32
    %c0_i32_0 = arith.constant 0 : i32
    %c0_i32_1 = arith.constant 0 : i32
    return %c0_i32, %c0_i32_0 : i32, i32
  }
  func.func @transform_4(%arg0: i32) -> (i32, i32) {
    %c0_i32 = arith.constant 0 : i32
    %c0_i32_0 = arith.constant 0 : i32
    return %arg0, %c0_i32 : i32, i32
  }
  func.func @transform_5(%arg0: i32) -> (i32, i32, i32) {
    %c0_i32 = arith.constant 0 : i32
    %c0_i32_0 = arith.constant 0 : i32
    %c0_i32_1 = arith.constant 0 : i32
    return %arg0, %c0_i32, %c0_i32_0 : i32, i32, i32
  }
}

</mosaic_0001>

<llo_original>
// kernel: tpu_custom_call.1
$region0: #{tpu_custom_call.1}
  #allocation0 [shape = 'u32[]', space=smem, size = 0x4, offset = 0x4, fixed_abs, tag = 'smem constant byte address 0x4 - core index']
  #allocation1 [shape = 'u32[144,128]{1,0:T(1,128)}', space=vmem, size = 0x12000, scoped, tag = 'internal scratch']
  %s0 = inlined_call_operand.vmem [shape: f32[128,32], index: 0, kind: input, shape index: {}]
  %s1 = inlined_call_operand.vmem [shape: f32[32,128], index: 1, kind: input, shape index: {}]
  %s2 = inlined_call_operand.vmem [shape: f32[128,64], index: 2, kind: input, shape index: {}]
  %s3 = inlined_call_operand.vmem [shape: f32[64,128], index: 3, kind: input, shape index: {}]
  %s4 = inlined_call_operand.vmem [shape: s8[128,128], index: 4, kind: input, shape index: {}]
  %s5 = inlined_call_operand.hbm [shape: f32[1,8,128], index: 5, kind: output, shape index: {}]
  %s6 = sld [smem:[#allocation0]]
  $region30: #{tpu_custom_call.1} parent=0
    _
  %s8 = ssub.s32 1, %s6
  %s9 = scalar_select 0, %s8, %s6
  $region1: #{tpu_custom_call.1} parent=0
    #allocation2 [shape = 'u8[4096]{0}', space=vmem, size = 0x1000, scoped, tag = 'output window, operand 0, single buffered']
    #allocation3 [shape = 's32[1]{0}', space=sflag, size = 0x4, scoped, tag = 'scoped memory for tpu_custom_call.1']
    %10 = vsyncpa [#allocation3], 0
    // Predicated region
    $region2: #{tpu_custom_call.1} parent=1 // pred_check
      _
    $region3: #{tpu_custom_call.1} parent=1 // pred_check_branch
      %12 = sbr.rel (0) target = $region5
    $region4: #{tpu_custom_call.1} parent=1 // pred_region
      _
    $region5: #{tpu_custom_call.1} parent=1 // pred_fallthru
      _
    // Predicated region
    $region6: #{tpu_custom_call.1} parent=1 // pred_check
      _
    $region7: #{tpu_custom_call.1} parent=1 // pred_check_branch
      %14 = sbr.rel (0) target = $region9
    $region8: #{tpu_custom_call.1} parent=1 // pred_region
      _
    $region9: #{tpu_custom_call.1} parent=1 // pred_fallthru
      _
    // Predicated region
    $region10: #{tpu_custom_call.1} parent=1 // pred_check
      _
    $region11: #{tpu_custom_call.1} parent=1 // pred_check_branch
      %16 = sbr.rel (0) target = $region13
    $region12: #{tpu_custom_call.1} parent=1 // pred_region
      _
    $region13: #{tpu_custom_call.1} parent=1 // pred_fallthru
      _
    // Predicated region
    $region14: #{tpu_custom_call.1} parent=1 // pred_check
      _
    $region15: #{tpu_custom_call.1} parent=1 // pred_check_branch
      %18 = sbr.rel (0) target = $region17
    $region16: #{tpu_custom_call.1} parent=1 // pred_region
      _
    $region17: #{tpu_custom_call.1} parent=1 // pred_fallthru
      _
    // Predicated region
    $region18: #{tpu_custom_call.1} parent=1 // pred_check
      _
    $region19: #{tpu_custom_call.1} parent=1 // pred_check_branch
      %20 = sbr.rel (0) target = $region21
    $region20: #{tpu_custom_call.1} parent=1 // pred_region
      _
    $region21: #{tpu_custom_call.1} parent=1 // pred_fallthru
      _
    %v23 = vld [vmem:[%s0] sm:$0xff]
    %v24 = vld [vmem:[%s0 + $0x8] sm:$0xff]
    %v25 = vld [vmem:[%s0 + $0x10] sm:$0xff]
    %v26 = vld [vmem:[%s0 + $0x18] sm:$0xff]
    %v27 = vld [vmem:[%s0 + $0x20] sm:$0xff]
    %v28 = vld [vmem:[%s0 + $0x28] sm:$0xff]
    %v29 = vld [vmem:[%s0 + $0x30] sm:$0xff]
    %v30 = vld [vmem:[%s0 + $0x38] sm:$0xff]
    %v31 = vld [vmem:[%s0 + $0x40] sm:$0xff]
    %v32 = vld [vmem:[%s0 + $0x48] sm:$0xff]
    %v33 = vld [vmem:[%s0 + $0x50] sm:$0xff]
    %v34 = vld [vmem:[%s0 + $0x58] sm:$0xff]
    %v35 = vld [vmem:[%s0 + $0x60] sm:$0xff]
    %v36 = vld [vmem:[%s0 + $0x68] sm:$0xff]
    %v37 = vld [vmem:[%s0 + $0x70] sm:$0xff]
    %v38 = vld [vmem:[%s0 + $0x78] sm:$0xff]
    %v39 = vld [vmem:[%s1] sm:$0xff]
    %v40 = vld [vmem:[%s1 + $0x8] sm:$0xff]
    %v41 = vld [vmem:[%s1 + $0x10] sm:$0xff]
    %v42 = vld [vmem:[%s1 + $0x18] sm:$0xff]
    %vm43 = vcmask 261120
    %v45 = vsel %vm43, %v23, 0
    %v48 = vsel %vm43, %v24, 0
    %v51 = vsel %vm43, %v25, 0
    %v54 = vsel %vm43, %v26, 0
    %v57 = vsel %vm43, %v27, 0
    %v60 = vsel %vm43, %v28, 0
    %v63 = vsel %vm43, %v29, 0
    %v66 = vsel %vm43, %v30, 0
    %v69 = vsel %vm43, %v31, 0
    %v72 = vsel %vm43, %v32, 0
    %v75 = vsel %vm43, %v33, 0
    %v78 = vsel %vm43, %v34, 0
    %v81 = vsel %vm43, %v35, 0
    %v84 = vsel %vm43, %v36, 0
    %v87 = vsel %vm43, %v37, 0
    %v90 = vsel %vm43, %v38, 0
    %92 = vmatprep.subr.mxu0 0.0
    %93 = vmatpush1.msra.mxu0 %v39
    %94 = vmatprep.subr.mxu0 0.0
    %95 = vmatpush1.msra.mxu0 %v40
    %96 = vmatprep.subr.mxu0 0.0
    %97 = vmatpush1.msra.mxu0 %v41
    %98 = vmatprep.subr.mxu0 0.0
    %99 = vmatpush1.msra.mxu0 %v42
    %100 = vmatprep.subr.mxu0 0.0
    %101 = vmatpush1.msra.mxu0 0.0
    %102 = vmatprep.subr.mxu0 0.0
    %103 = vmatpush1.msra.mxu0 0.0
    %104 = vmatprep.subr.mxu0 0.0
    %105 = vmatpush1.msra.mxu0 0.0
    %106 = vmatprep.subr.mxu0 0.0
    %107 = vmatpush1.msra.mxu0 0.0
    %108 = vmatprep.subr.mxu0 0.0
    %109 = vmatpush1.msra.mxu0 0.0
    %110 = vmatprep.subr.mxu0 0.0
    %111 = vmatpush1.msra.mxu0 0.0
    %112 = vmatprep.subr.mxu0 0.0
    %113 = vmatpush1.msra.mxu0 0.0
    %114 = vmatprep.subr.mxu0 0.0
    %115 = vmatpush1.msra.mxu0 0.0
    %116 = vmatprep.subr.mxu0 0.0
    %117 = vmatpush1.msra.mxu0 0.0
    %118 = vmatprep.subr.mxu0 0.0
    %119 = vmatpush1.msra.mxu0 0.0
    %120 = vmatprep.subr.mxu0 0.0
    %121 = vmatpush1.msra.mxu0 0.0
    %122 = vmatprep.subr.mxu0 0.0
    %123 = vmatpush1.msra.mxu0 0.0
    %124 = vmatprep.subr.mxu0 0.0
    %125 = vmatpush1.msra.mxu0 0.0
    %126 = vmatprep.subr.mxu0 0.0
    %127 = vmatpush1.msra.mxu0 0.0
    %128 = vmatprep.subr.mxu0 0.0
    %129 = vmatpush1.msra.mxu0 0.0
    %130 = vmatprep.subr.mxu0 0.0
    %131 = vmatpush1.msra.mxu0 0.0
    %132 = vmatprep.subr.mxu0 0.0
    %133 = vmatpush1.msra.mxu0 0.0
    %134 = vmatprep.subr.mxu0 0.0
    %135 = vmatpush1.msra.mxu0 0.0
    %136 = vmatprep.subr.mxu0 0.0
    %137 = vmatpush1.msra.mxu0 0.0
    %138 = vmatprep.subr.mxu0 0.0
    %139 = vmatpush1.msra.mxu0 0.0
    %140 = vmatprep.subr.mxu0 0.0
    %141 = vmatpush1.msra.mxu0 0.0
    %142 = vmatprep.subr.mxu0 0.0
    %143 = vmatpush1.msra.mxu0 0.0
    %144 = vmatprep.subr.mxu0 0.0
    %145 = vmatpush1.msra.mxu0 0.0
    %146 = vmatprep.subr.mxu0 0.0
    %147 = vmatpush1.msra.mxu0 0.0
    %148 = vmatprep.subr.mxu0 0.0
    %149 = vmatpush1.msra.mxu0 0.0
    %150 = vmatprep.subr.mxu0 0.0
    %151 = vmatpush1.msra.mxu0 0.0
    %152 = vmatprep.subr.mxu0 0.0
    %153 = vmatpush1.msra.mxu0 0.0
    %154 = vmatprep.subr.mxu0 0.0
    %155 = vmatpush1.msra.mxu0 0.0
    %156 = vmatprep.mubr.f32.mxu0 0.0
    %157 = vmatmul.mubr.f32.gmra.mrb[0].mxu0 %v45
    %v158 = vpop.f32.mrb[0].mxu0
    %v159 = vadd.f32 0.0, %v158
    %v160 = vpop.f32.mrb[0].mxu0
    %161 = vmatprep.mubr.f32.mxu0 0.0
    %162 = vmatmul.mubr.f32.gmra.mrb[0].mxu0 %v48
    %v163 = vpop.f32.mrb[0].mxu0
    %v164 = vadd.f32 0.0, %v163
    %v165 = vpop.f32.mrb[0].mxu0
    %166 = vmatprep.mubr.f32.mxu0 0.0
    %167 = vmatmul.mubr.f32.gmra.mrb[0].mxu0 %v51
    %v168 = vpop.f32.mrb[0].mxu0
    %v169 = vadd.f32 0.0, %v168
    %v170 = vpop.f32.mrb[0].mxu0
    %171 = vmatprep.mubr.f32.mxu0 0.0
    %172 = vmatmul.mubr.f32.gmra.mrb[0].mxu0 %v54
    %v173 = vpop.f32.mrb[0].mxu0
    %v174 = vadd.f32 0.0, %v173
    %v175 = vpop.f32.mrb[0].mxu0
    %176 = vmatprep.mubr.f32.mxu0 0.0
    %177 = vmatmul.mubr.f32.gmra.mrb[0].mxu0 %v57
    %v178 = vpop.f32.mrb[0].mxu0
    %v179 = vadd.f32 0.0, %v178
    %v180 = vpop.f32.mrb[0].mxu0
    %181 = vmatprep.mubr.f32.mxu0 0.0
    %182 = vmatmul.mubr.f32.gmra.mrb[0].mxu0 %v60
    %v183 = vpop.f32.mrb[0].mxu0
    %v184 = vadd.f32 0.0, %v183
    %v185 = vpop.f32.mrb[0].mxu0
    %186 = vmatprep.mubr.f32.mxu0 0.0
    %187 = vmatmul.mubr.f32.gmra.mrb[0].mxu0 %v63
    %v188 = vpop.f32.mrb[0].mxu0
    %v189 = vadd.f32 0.0, %v188
    %v190 = vpop.f32.mrb[0].mxu0
    %191 = vmatprep.mubr.f32.mxu0 0.0
    %192 = vmatmul.mubr.f32.gmra.mrb[0].mxu0 %v66
    %v193 = vpop.f32.mrb[0].mxu0
    %v194 = vadd.f32 0.0, %v193
    %v195 = vpop.f32.mrb[0].mxu0
    %196 = vmatprep.mubr.f32.mxu0 0.0
    %197 = vmatmul.mubr.f32.gmra.mrb[0].mxu0 %v69
    %v198 = vpop.f32.mrb[0].mxu0
    %v199 = vadd.f32 0.0, %v198
    %v200 = vpop.f32.mrb[0].mxu0
    %201 = vmatprep.mubr.f32.mxu0 0.0
    %202 = vmatmul.mubr.f32.gmra.mrb[0].mxu0 %v72
    %v203 = vpop.f32.mrb[0].mxu0
    %v204 = vadd.f32 0.0, %v203
    %v205 = vpop.f32.mrb[0].mxu0
    %206 = vmatprep.mubr.f32.mxu0 0.0
    %207 = vmatmul.mubr.f32.gmra.mrb[0].mxu0 %v75
    %v208 = vpop.f32.mrb[0].mxu0
    %v209 = vadd.f32 0.0, %v208
    %v210 = vpop.f32.mrb[0].mxu0
    %211 = vmatprep.mubr.f32.mxu0 0.0
    %212 = vmatmul.mubr.f32.gmra.mrb[0].mxu0 %v78
    %v213 = vpop.f32.mrb[0].mxu0
    %v214 = vadd.f32 0.0, %v213
    %v215 = vpop.f32.mrb[0].mxu0
    %216 = vmatprep.mubr.f32.mxu0 0.0
    %217 = vmatmul.mubr.f32.gmra.mrb[0].mxu0 %v81
    %v218 = vpop.f32.mrb[0].mxu0
    %v219 = vadd.f32 0.0, %v218
    %v220 = vpop.f32.mrb[0].mxu0
    %221 = vmatprep.mubr.f32.mxu0 0.0
    %222 = vmatmul.mubr.f32.gmra.mrb[0].mxu0 %v84
    %v223 = vpop.f32.mrb[0].mxu0
    %v224 = vadd.f32 0.0, %v223
    %v225 = vpop.f32.mrb[0].mxu0
    %226 = vmatprep.mubr.f32.mxu0 0.0
    %227 = vmatmul.mubr.f32.gmra.mrb[0].mxu0 %v87
    %v228 = vpop.f32.mrb[0].mxu0
    %v229 = vadd.f32 0.0, %v228
    %v230 = vpop.f32.mrb[0].mxu0
    %231 = vmatprep.mubr.f32.mxu0 0.0
    %232 = vmatmul.mubr.f32.gmra.mrb[0].mxu0 %v90
    %v233 = vpop.f32.mrb[0].mxu0
    %v234 = vadd.f32 0.0, %v233
    %v235 = vpop.f32.mrb[0].mxu0
    %236 = vdwg.mxu0
    %v237 = vld [vmem:[%s2] sm:$0xff]
    %v238 = vld [vmem:[%s2 + $0x8] sm:$0xff]
    %v239 = vld [vmem:[%s2 + $0x10] sm:$0xff]
    %v240 = vld [vmem:[%s2 + $0x18] sm:$0xff]
    %v241 = vld [vmem:[%s2 + $0x20] sm:$0xff]
    %v242 = vld [vmem:[%s2 + $0x28] sm:$0xff]
    %v243 = vld [vmem:[%s2 + $0x30] sm:$0xff]
    %v244 = vld [vmem:[%s2 + $0x38] sm:$0xff]
    %v245 = vld [vmem:[%s2 + $0x40] sm:$0xff]
    %v246 = vld [vmem:[%s2 + $0x48] sm:$0xff]
    %v247 = vld [vmem:[%s2 + $0x50] sm:$0xff]
    %v248 = vld [vmem:[%s2 + $0x58] sm:$0xff]
    %v249 = vld [vmem:[%s2 + $0x60] sm:$0xff]
    %v250 = vld [vmem:[%s2 + $0x68] sm:$0xff]
    %v251 = vld [vmem:[%s2 + $0x70] sm:$0xff]
    %v252 = vld [vmem:[%s2 + $0x78] sm:$0xff]
    %v253 = vld [vmem:[%s3] sm:$0xff]
    %v254 = vld [vmem:[%s3 + $0x8] sm:$0xff]
    %v255 = vld [vmem:[%s3 + $0x10] sm:$0xff]
    %v256 = vld [vmem:[%s3 + $0x18] sm:$0xff]
    %v257 = vld [vmem:[%s3 + $0x20] sm:$0xff]
    %v258 = vld [vmem:[%s3 + $0x28] sm:$0xff]
    %v259 = vld [vmem:[%s3 + $0x30] sm:$0xff]
    %v260 = vld [vmem:[%s3 + $0x38] sm:$0xff]
    %vm261 = vcmask 523264
    %v263 = vsel %vm261, %v237, 0
    %v266 = vsel %vm261, %v238, 0
    %v269 = vsel %vm261, %v239, 0
    %v272 = vsel %vm261, %v240, 0
    %v275 = vsel %vm261, %v241, 0
    %v278 = vsel %vm261, %v242, 0
    %v281 = vsel %vm261, %v243, 0
    %v284 = vsel %vm261, %v244, 0
    %v287 = vsel %vm261, %v245, 0
    %v290 = vsel %vm261, %v246, 0
    %v293 = vsel %vm261, %v247, 0
    %v296 = vsel %vm261, %v248, 0
    %v299 = vsel %vm261, %v249, 0
    %v302 = vsel %vm261, %v250, 0
    %v305 = vsel %vm261, %v251, 0
    %v308 = vsel %vm261, %v252, 0
    %310 = vmatprep.subr.mxu0 0.0
    %311 = vmatpush1.msra.mxu0 %v253
    %312 = vmatprep.subr.mxu0 0.0
    %313 = vmatpush1.msra.mxu0 %v254
    %314 = vmatprep.subr.mxu0 0.0
    %315 = vmatpush1.msra.mxu0 %v255
    %316 = vmatprep.subr.mxu0 0.0
    %317 = vmatpush1.msra.mxu0 %v256
    %318 = vmatprep.subr.mxu0 0.0
    %319 = vmatpush1.msra.mxu0 %v257
    %320 = vmatprep.subr.mxu0 0.0
    %321 = vmatpush1.msra.mxu0 %v258
    %322 = vmatprep.subr.mxu0 0.0
    %323 = vmatpush1.msra.mxu0 %v259
    %324 = vmatprep.subr.mxu0 0.0
    %325 = vmatpush1.msra.mxu0 %v260
    %326 = vmatprep.subr.mxu0 0.0
    %327 = vmatpush1.msra.mxu0 0.0
    %328 = vmatprep.subr.mxu0 0.0
    %329 = vmatpush1.msra.mxu0 0.0
    %330 = vmatprep.subr.mxu0 0.0
    %331 = vmatpush1.msra.mxu0 0.0
    %332 = vmatprep.subr.mxu0 0.0
    %333 = vmatpush1.msra.mxu0 0.0
    %334 = vmatprep.subr.mxu0 0.0
    %335 = vmatpush1.msra.mxu0 0.0
    %336 = vmatprep.subr.mxu0 0.0
    %337 = vmatpush1.msra.mxu0 0.0
    %338 = vmatprep.subr.mxu0 0.0
    %339 = vmatpush1.msra.mxu0 0.0
    %340 = vmatprep.subr.mxu0 0.0
    %341 = vmatpush1.msra.mxu0 0.0
    %342 = vmatprep.subr.mxu0 0.0
    %343 = vmatpush1.msra.mxu0 0.0
    %344 = vmatprep.subr.mxu0 0.0
    %345 = vmatpush1.msra.mxu0 0.0
    %346 = vmatprep.subr.mxu0 0.0
    %347 = vmatpush1.msra.mxu0 0.0
    %348 = vmatprep.subr.mxu0 0.0
    %349 = vmatpush1.msra.mxu0 0.0
    %350 = vmatprep.subr.mxu0 0.0
    %351 = vmatpush1.msra.mxu0 0.0
    %352 = vmatprep.subr.mxu0 0.0
    %353 = vmatpush1.msra.mxu0 0.0
    %354 = vmatprep.subr.mxu0 0.0
    %355 = vmatpush1.msra.mxu0 0.0
    %356 = vmatprep.subr.mxu0 0.0
    %357 = vmatpush1.msra.mxu0 0.0
    %358 = vmatprep.subr.mxu0 0.0
    %359 = vmatpush1.msra.mxu0 0.0
    %360 = vmatprep.subr.mxu0 0.0
    %361 = vmatpush1.msra.mxu0 0.0
    %362 = vmatprep.subr.mxu0 0.0
    %363 = vmatpush1.msra.mxu0 0.0
    %364 = vmatprep.subr.mxu0 0.0
    %365 = vmatpush1.msra.mxu0 0.0
    %366 = vmatprep.subr.mxu0 0.0
    %367 = vmatpush1.msra.mxu0 0.0
    %368 = vmatprep.subr.mxu0 0.0
    %369 = vmatpush1.msra.mxu0 0.0
    %370 = vmatprep.subr.mxu0 0.0
    %371 = vmatpush1.msra.mxu0 0.0
    %372 = vmatprep.subr.mxu0 0.0
    %373 = vmatpush1.msra.mxu0 0.0
    %374 = vmatprep.mubr.f32.mxu0 0.0
    %375 = vmatmul.mubr.f32.gmra.mrb[0].mxu0 %v263
    %v376 = vpop.f32.mrb[0].mxu0
    %v377 = vadd.f32 0.0, %v376
    %v378 = vpop.f32.mrb[0].mxu0
    %379 = vmatprep.mubr.f32.mxu0 0.0
    %380 = vmatmul.mubr.f32.gmra.mrb[0].mxu0 %v266
    %v381 = vpop.f32.mrb[0].mxu0
    %v382 = vadd.f32 0.0, %v381
    %v383 = vpop.f32.mrb[0].mxu0
    %384 = vmatprep.mubr.f32.mxu0 0.0
    %385 = vmatmul.mubr.f32.gmra.mrb[0].mxu0 %v269
    %v386 = vpop.f32.mrb[0].mxu0
    %v387 = vadd.f32 0.0, %v386
    %v388 = vpop.f32.mrb[0].mxu0
    %389 = vmatprep.mubr.f32.mxu0 0.0
    %390 = vmatmul.mubr.f32.gmra.mrb[0].mxu0 %v272
    %v391 = vpop.f32.mrb[0].mxu0
    %v392 = vadd.f32 0.0, %v391
    %v393 = vpop.f32.mrb[0].mxu0
    %394 = vmatprep.mubr.f32.mxu0 0.0
    %395 = vmatmul.mubr.f32.gmra.mrb[0].mxu0 %v275
    %v396 = vpop.f32.mrb[0].mxu0
    %v397 = vadd.f32 0.0, %v396
    %v398 = vpop.f32.mrb[0].mxu0
    %399 = vmatprep.mubr.f32.mxu0 0.0
    %400 = vmatmul.mubr.f32.gmra.mrb[0].mxu0 %v278
    %v401 = vpop.f32.mrb[0].mxu0
    %v402 = vadd.f32 0.0, %v401
    %v403 = vpop.f32.mrb[0].mxu0
    %404 = vmatprep.mubr.f32.mxu0 0.0
    %405 = vmatmul.mubr.f32.gmra.mrb[0].mxu0 %v281
    %v406 = vpop.f32.mrb[0].mxu0
    %v407 = vadd.f32 0.0, %v406
    %v408 = vpop.f32.mrb[0].mxu0
    %409 = vmatprep.mubr.f32.mxu0 0.0
    %410 = vmatmul.mubr.f32.gmra.mrb[0].mxu0 %v284
    %v411 = vpop.f32.mrb[0].mxu0
    %v412 = vadd.f32 0.0, %v411
    %v413 = vpop.f32.mrb[0].mxu0
    %414 = vmatprep.mubr.f32.mxu0 0.0
    %415 = vmatmul.mubr.f32.gmra.mrb[0].mxu0 %v287
    %v416 = vpop.f32.mrb[0].mxu0
    %v417 = vadd.f32 0.0, %v416
    %v418 = vpop.f32.mrb[0].mxu0
    %419 = vmatprep.mubr.f32.mxu0 0.0
    %420 = vmatmul.mubr.f32.gmra.mrb[0].mxu0 %v290
    %v421 = vpop.f32.mrb[0].mxu0
    %v422 = vadd.f32 0.0, %v421
    %v423 = vpop.f32.mrb[0].mxu0
    %424 = vmatprep.mubr.f32.mxu0 0.0
    %425 = vmatmul.mubr.f32.gmra.mrb[0].mxu0 %v293
    %v426 = vpop.f32.mrb[0].mxu0
    %v427 = vadd.f32 0.0, %v426
    %v428 = vpop.f32.mrb[0].mxu0
    %429 = vmatprep.mubr.f32.mxu0 0.0
    %430 = vmatmul.mubr.f32.gmra.mrb[0].mxu0 %v296
    %v431 = vpop.f32.mrb[0].mxu0
    %v432 = vadd.f32 0.0, %v431
    %v433 = vpop.f32.mrb[0].mxu0
    %434 = vmatprep.mubr.f32.mxu0 0.0
    %435 = vmatmul.mubr.f32.gmra.mrb[0].mxu0 %v299
    %v436 = vpop.f32.mrb[0].mxu0
    %v437 = vadd.f32 0.0, %v436
    %v438 = vpop.f32.mrb[0].mxu0
    %439 = vmatprep.mubr.f32.mxu0 0.0
    %440 = vmatmul.mubr.f32.gmra.mrb[0].mxu0 %v302
    %v441 = vpop.f32.mrb[0].mxu0
    %v442 = vadd.f32 0.0, %v441
    %v443 = vpop.f32.mrb[0].mxu0
    %444 = vmatprep.mubr.f32.mxu0 0.0
    %445 = vmatmul.mubr.f32.gmra.mrb[0].mxu0 %v305
    %v446 = vpop.f32.mrb[0].mxu0
    %v447 = vadd.f32 0.0, %v446
    %v448 = vpop.f32.mrb[0].mxu0
    %449 = vmatprep.mubr.f32.mxu0 0.0
    %450 = vmatmul.mubr.f32.gmra.mrb[0].mxu0 %v308
    %v451 = vpop.f32.mrb[0].mxu0
    %v452 = vadd.f32 0.0, %v451
    %v453 = vpop.f32.mrb[0].mxu0
    %454 = vdwg.mxu0
    %v455 = vld [vmem:[%s4] sm:$0xff]
    %v456 = vld [vmem:[%s4 + $0x8] sm:$0xff]
    %v457 = vld [vmem:[%s4 + $0x10] sm:$0xff]
    %v458 = vld [vmem:[%s4 + $0x18] sm:$0xff]
    %vm459 = vnez %v455
    %vm460 = vnez %v456
    %vm461 = vnez %v457
    %vm462 = vnez %v458
    %v463 = vsel %vm459, 16843009, 0
    %v464 = vsel %vm460, 16843009, 0
    %v465 = vsel %vm461, 16843009, 0
    %v466 = vsel %vm462, 16843009, 0
    %v467 = vunpack.c.0.s8 %v463
    %v468 = vunpack.c.1.s8 %v463
    %v469 = vunpack.c.2.s8 %v463
    %v470 = vunpack.c.3.s8 %v463
    %v471 = vunpack.c.0.s8 %v464
    %v472 = vunpack.c.1.s8 %v464
    %v473 = vunpack.c.2.s8 %v464
    %v474 = vunpack.c.3.s8 %v464
    %v475 = vunpack.c.0.s8 %v465
    %v476 = vunpack.c.1.s8 %v465
    %v477 = vunpack.c.2.s8 %v465
    %v478 = vunpack.c.3.s8 %v465
    %v479 = vunpack.c.0.s8 %v466
    %v480 = vunpack.c.1.s8 %v466
    %v481 = vunpack.c.2.s8 %v466
    %v482 = vunpack.c.3.s8 %v466
    %v483 = vpack.c.b16 %v467, %v467
    %v484 = vpack.c.b8 %v483, %v483
    %v485 = vpack.c.b16 %v468, %v468
    %v486 = vpack.c.b8 %v485, %v485
    %v487 = vpack.c.b16 %v469, %v469
    %v488 = vpack.c.b8 %v487, %v487
    %v489 = vpack.c.b16 %v470, %v470
    %v490 = vpack.c.b8 %v489, %v489
    %v491 = vpack.c.b16 %v471, %v471
    %v492 = vpack.c.b8 %v491, %v491
    %v493 = vpack.c.b16 %v472, %v472
    %v494 = vpack.c.b8 %v493, %v493
    %v495 = vpack.c.b16 %v473, %v473
    %v496 = vpack.c.b8 %v495, %v495
    %v497 = vpack.c.b16 %v474, %v474
    %v498 = vpack.c.b8 %v497, %v497
    %v499 = vpack.c.b16 %v475, %v475
    %v500 = vpack.c.b8 %v499, %v499
    %v501 = vpack.c.b16 %v476, %v476
    %v502 = vpack.c.b8 %v501, %v501
    %v503 = vpack.c.b16 %v477, %v477
    %v504 = vpack.c.b8 %v503, %v503
    %v505 = vpack.c.b16 %v478, %v478
    %v506 = vpack.c.b8 %v505, %v505
    %v507 = vpack.c.b16 %v479, %v479
    %v508 = vpack.c.b8 %v507, %v507
    %v509 = vpack.c.b16 %v480, %v480
    %v510 = vpack.c.b8 %v509, %v509
    %v511 = vpack.c.b16 %v481, %v481
    %v512 = vpack.c.b8 %v511, %v511
    %v513 = vpack.c.b16 %v482, %v482
    %v514 = vpack.c.b8 %v513, %v513
    %vm515 = vnez %v484
    %vm516 = vnez %v486
    %vm517 = vnez %v488
    %vm518 = vnez %v490
    %vm519 = vnez %v492
    %vm520 = vnez %v494
    %vm521 = vnez %v496
    %vm522 = vnez %v498
    %vm523 = vnez %v500
    %vm524 = vnez %v502
    %vm525 = vnez %v504
    %vm526 = vnez %v506
    %vm527 = vnez %v508
    %vm528 = vnez %v510
    %vm529 = vnez %v512
    %vm530 = vnez %v514
    %v531 = vsel %vm515, 16843009, 0
    %v532 = vsel %vm516, 16843009, 0
    %v533 = vsel %vm517, 16843009, 0
    %v534 = vsel %vm518, 16843009, 0
    %v535 = vsel %vm519, 16843009, 0
    %v536 = vsel %vm520, 16843009, 0
    %v537 = vsel %vm521, 16843009, 0
    %v538 = vsel %vm522, 16843009, 0
    %v539 = vsel %vm523, 16843009, 0
    %v540 = vsel %vm524, 16843009, 0
    %v541 = vsel %vm525, 16843009, 0
    %v542 = vsel %vm526, 16843009, 0
    %v543 = vsel %vm527, 16843009, 0
    %v544 = vsel %vm528, 16843009, 0
    %v545 = vsel %vm529, 16843009, 0
    %v546 = vsel %vm530, 16843009, 0
    %v547 = vunpack.c.0.s8 %v531
    %v548 = vunpack.c.0.s8 %v532
    %v549 = vunpack.c.0.s8 %v533
    %v550 = vunpack.c.0.s8 %v534
    %v551 = vunpack.c.0.s8 %v535
    %v552 = vunpack.c.0.s8 %v536
    %v553 = vunpack.c.0.s8 %v537
    %v554 = vunpack.c.0.s8 %v538
    %v555 = vunpack.c.0.s8 %v539
    %v556 = vunpack.c.0.s8 %v540
    %v557 = vunpack.c.0.s8 %v541
    %v558 = vunpack.c.0.s8 %v542
    %v559 = vunpack.c.0.s8 %v543
    %v560 = vunpack.c.0.s8 %v544
    %v561 = vunpack.c.0.s8 %v545
    %v562 = vunpack.c.0.s8 %v546
    %vm563 = vcmp.ne.s32.totalorder %v547, 0
    %vm564 = vcmp.ne.s32.totalorder %v548, 0
    %vm565 = vcmp.ne.s32.totalorder %v549, 0
    %vm566 = vcmp.ne.s32.totalorder %v550, 0
    %vm567 = vcmp.ne.s32.totalorder %v551, 0
    %vm568 = vcmp.ne.s32.totalorder %v552, 0
    %vm569 = vcmp.ne.s32.totalorder %v553, 0
    %vm570 = vcmp.ne.s32.totalorder %v554, 0
    %vm571 = vcmp.ne.s32.totalorder %v555, 0
    %vm572 = vcmp.ne.s32.totalorder %v556, 0
    %vm573 = vcmp.ne.s32.totalorder %v557, 0
    %vm574 = vcmp.ne.s32.totalorder %v558, 0
    %vm575 = vcmp.ne.s32.totalorder %v559, 0
    %vm576 = vcmp.ne.s32.totalorder %v560, 0
    %vm577 = vcmp.ne.s32.totalorder %v561, 0
    %vm578 = vcmp.ne.s32.totalorder %v562, 0
    %v579 = vsel %vm563, %v159, -1e+30
    %v580 = vsel %vm564, %v164, -1e+30
    %v581 = vsel %vm565, %v169, -1e+30
    %v582 = vsel %vm566, %v174, -1e+30
    %v583 = vsel %vm567, %v179, -1e+30
    %v584 = vsel %vm568, %v184, -1e+30
    %v585 = vsel %vm569, %v189, -1e+30
    %v586 = vsel %vm570, %v194, -1e+30
    %v587 = vsel %vm571, %v199, -1e+30
    %v588 = vsel %vm572, %v204, -1e+30
    %v589 = vsel %vm573, %v209, -1e+30
    %v590 = vsel %vm574, %v214, -1e+30
    %v591 = vsel %vm575, %v219, -1e+30
    %v592 = vsel %vm576, %v224, -1e+30
    %v593 = vsel %vm577, %v229, -1e+30
    %v594 = vsel %vm578, %v234, -1e+30
    %595 = vmax.xlane.f32.xlu0 %v579
    %v596 = vpop.xlane.xlu0 %595
    %597 = vmax.xlane.f32.xlu0 %v580
    %v598 = vpop.xlane.xlu0 %597
    %599 = vmax.xlane.f32.xlu0 %v581
    %v600 = vpop.xlane.xlu0 %599
    %601 = vmax.xlane.f32.xlu0 %v582
    %v602 = vpop.xlane.xlu0 %601
    %603 = vmax.xlane.f32.xlu0 %v583
    %v604 = vpop.xlane.xlu0 %603
    %605 = vmax.xlane.f32.xlu0 %v584
    %v606 = vpop.xlane.xlu0 %605
    %607 = vmax.xlane.f32.xlu0 %v585
    %v608 = vpop.xlane.xlu0 %607
    %609 = vmax.xlane.f32.xlu0 %v586
    %v610 = vpop.xlane.xlu0 %609
    %611 = vmax.xlane.f32.xlu0 %v587
    %v612 = vpop.xlane.xlu0 %611
    %613 = vmax.xlane.f32.xlu0 %v588
    %v614 = vpop.xlane.xlu0 %613
    %615 = vmax.xlane.f32.xlu0 %v589
    %v616 = vpop.xlane.xlu0 %615
    %617 = vmax.xlane.f32.xlu0 %v590
    %v618 = vpop.xlane.xlu0 %617
    %619 = vmax.xlane.f32.xlu0 %v591
    %v620 = vpop.xlane.xlu0 %619
    %621 = vmax.xlane.f32.xlu0 %v592
    %v622 = vpop.xlane.xlu0 %621
    %623 = vmax.xlane.f32.xlu0 %v593
    %v624 = vpop.xlane.xlu0 %623
    %625 = vmax.xlane.f32.xlu0 %v594
    %v626 = vpop.xlane.xlu0 %625
    %v627 = vsub.f32 %v579, %v596
    %v628 = vsub.f32 %v580, %v598
    %v629 = vsub.f32 %v581, %v600
    %v630 = vsub.f32 %v582, %v602
    %v631 = vsub.f32 %v583, %v604
    %v632 = vsub.f32 %v584, %v606
    %v633 = vsub.f32 %v585, %v608
    %v634 = vsub.f32 %v586, %v610
    %v635 = vsub.f32 %v587, %v612
    %v636 = vsub.f32 %v588, %v614
    %v637 = vsub.f32 %v589, %v616
    %v638 = vsub.f32 %v590, %v618
    %v639 = vsub.f32 %v591, %v620
    %v640 = vsub.f32 %v592, %v622
    %v641 = vsub.f32 %v593, %v624
    %v642 = vsub.f32 %v594, %v626
    %v643 = vmul.f32 %v627, 1.442695
    %v644 = vpow.pop %v643
    %v645 = vmul.f32 %v628, 1.442695
    %v646 = vpow.pop %v645
    %v647 = vmul.f32 %v629, 1.442695
    %v648 = vpow.pop %v647
    %v649 = vmul.f32 %v630, 1.442695
    %v650 = vpow.pop %v649
    %v651 = vmul.f32 %v631, 1.442695
    %v652 = vpow.pop %v651
    %v653 = vmul.f32 %v632, 1.442695
    %v654 = vpow.pop %v653
    %v655 = vmul.f32 %v633, 1.442695
    %v656 = vpow.pop %v655
    %v657 = vmul.f32 %v634, 1.442695
    %v658 = vpow.pop %v657
    %v659 = vmul.f32 %v635, 1.442695
    %v660 = vpow.pop %v659
    %v661 = vmul.f32 %v636, 1.442695
    %v662 = vpow.pop %v661
    %v663 = vmul.f32 %v637, 1.442695
    %v664 = vpow.pop %v663
    %v665 = vmul.f32 %v638, 1.442695
    %v666 = vpow.pop %v665
    %v667 = vmul.f32 %v639, 1.442695
    %v668 = vpow.pop %v667
    %v669 = vmul.f32 %v640, 1.442695
    %v670 = vpow.pop %v669
    %v671 = vmul.f32 %v641, 1.442695
    %v672 = vpow.pop %v671
    %v673 = vmul.f32 %v642, 1.442695
    %v674 = vpow.pop %v673
    %675 = vadd.xlane.f32.xlu0 %v644
    %v676 = vpop.xlane.xlu0 %675
    %677 = vadd.xlane.f32.xlu0 %v646
    %v678 = vpop.xlane.xlu0 %677
    %679 = vadd.xlane.f32.xlu0 %v648
    %v680 = vpop.xlane.xlu0 %679
    %681 = vadd.xlane.f32.xlu0 %v650
    %v682 = vpop.xlane.xlu0 %681
    %683 = vadd.xlane.f32.xlu0 %v652
    %v684 = vpop.xlane.xlu0 %683
    %685 = vadd.xlane.f32.xlu0 %v654
    %v686 = vpop.xlane.xlu0 %685
    %687 = vadd.xlane.f32.xlu0 %v656
    %v688 = vpop.xlane.xlu0 %687
    %689 = vadd.xlane.f32.xlu0 %v658
    %v690 = vpop.xlane.xlu0 %689
    %691 = vadd.xlane.f32.xlu0 %v660
    %v692 = vpop.xlane.xlu0 %691
    %693 = vadd.xlane.f32.xlu0 %v662
    %v694 = vpop.xlane.xlu0 %693
    %695 = vadd.xlane.f32.xlu0 %v664
    %v696 = vpop.xlane.xlu0 %695
    %697 = vadd.xlane.f32.xlu0 %v666
    %v698 = vpop.xlane.xlu0 %697
    %699 = vadd.xlane.f32.xlu0 %v668
    %v700 = vpop.xlane.xlu0 %699
    %701 = vadd.xlane.f32.xlu0 %v670
    %v702 = vpop.xlane.xlu0 %701
    %703 = vadd.xlane.f32.xlu0 %v672
    %v704 = vpop.xlane.xlu0 %703
    %705 = vadd.xlane.f32.xlu0 %v674
    %v706 = vpop.xlane.xlu0 %705
    %v707 = vlog2.pop %v676
    %v708 = vmul.f32 %v707, 0.6931472
    %v709 = vlog2.pop %v678
    %v710 = vmul.f32 %v709, 0.6931472
    %v711 = vlog2.pop %v680
    %v712 = vmul.f32 %v711, 0.6931472
    %v713 = vlog2.pop %v682
    %v714 = vmul.f32 %v713, 0.6931472
    %v715 = vlog2.pop %v684
    %v716 = vmul.f32 %v715, 0.6931472
    %v717 = vlog2.pop %v686
    %v718 = vmul.f32 %v717, 0.6931472
    %v719 = vlog2.pop %v688
    %v720 = vmul.f32 %v719, 0.6931472
    %v721 = vlog2.pop %v690
    %v722 = vmul.f32 %v721, 0.6931472
    %v723 = vlog2.pop %v692
    %v724 = vmul.f32 %v723, 0.6931472
    %v725 = vlog2.pop %v694
    %v726 = vmul.f32 %v725, 0.6931472
    %v727 = vlog2.pop %v696
    %v728 = vmul.f32 %v727, 0.6931472
    %v729 = vlog2.pop %v698
    %v730 = vmul.f32 %v729, 0.6931472
    %v731 = vlog2.pop %v700
    %v732 = vmul.f32 %v731, 0.6931472
    %v733 = vlog2.pop %v702
    %v734 = vmul.f32 %v733, 0.6931472
    %v735 = vlog2.pop %v704
    %v736 = vmul.f32 %v735, 0.6931472
    %v737 = vlog2.pop %v706
    %v738 = vmul.f32 %v737, 0.6931472
    %v739 = vadd.f32 %v596, %v708
    %v740 = vadd.f32 %v598, %v710
    %v741 = vadd.f32 %v600, %v712
    %v742 = vadd.f32 %v602, %v714
    %v743 = vadd.f32 %v604, %v716
    %v744 = vadd.f32 %v606, %v718
    %v745 = vadd.f32 %v608, %v720
    %v746 = vadd.f32 %v610, %v722
    %v747 = vadd.f32 %v612, %v724
    %v748 = vadd.f32 %v614, %v726
    %v749 = vadd.f32 %v616, %v728
    %v750 = vadd.f32 %v618, %v730
    %v751 = vadd.f32 %v620, %v732
    %v752 = vadd.f32 %v622, %v734
    %v753 = vadd.f32 %v624, %v736
    %v754 = vadd.f32 %v626, %v738
    %v755 = vsub.f32 %v579, %v739
    %v756 = vsub.f32 %v580, %v740
    %v757 = vsub.f32 %v581, %v741
    %v758 = vsub.f32 %v582, %v742
    %v759 = vsub.f32 %v583, %v743
    %v760 = vsub.f32 %v584, %v744
    %v761 = vsub.f32 %v585, %v745
    %v762 = vsub.f32 %v586, %v746
    %v763 = vsub.f32 %v587, %v747
    %v764 = vsub.f32 %v588, %v748
    %v765 = vsub.f32 %v589, %v749
    %v766 = vsub.f32 %v590, %v750
    %v767 = vsub.f32 %v591, %v751
    %v768 = vsub.f32 %v592, %v752
    %v769 = vsub.f32 %v593, %v753
    %v770 = vsub.f32 %v594, %v754
    %v771 = vsel %vm563, %v377, -1e+30
    %v772 = vsel %vm564, %v382, -1e+30
    %v773 = vsel %vm565, %v387, -1e+30
    %v774 = vsel %vm566, %v392, -1e+30
    %v775 = vsel %vm567, %v397, -1e+30
    %v776 = vsel %vm568, %v402, -1e+30
    %v777 = vsel %vm569, %v407, -1e+30
    %v778 = vsel %vm570, %v412, -1e+30
    %v779 = vsel %vm571, %v417, -1e+30
    %v780 = vsel %vm572, %v422, -1e+30
    %v781 = vsel %vm573, %v427, -1e+30
    %v782 = vsel %vm574, %v432, -1e+30
    %v783 = vsel %vm575, %v437, -1e+30
    %v784 = vsel %vm576, %v442, -1e+30
    %v785 = vsel %vm577, %v447, -1e+30
    %v786 = vsel %vm578, %v452, -1e+30
    %787 = vmax.xlane.f32.xlu0 %v771
    %v788 = vpop.xlane.xlu0 %787
    %789 = vmax.xlane.f32.xlu0 %v772
    %v790 = vpop.xlane.xlu0 %789
    %791 = vmax.xlane.f32.xlu0 %v773
    %v792 = vpop.xlane.xlu0 %791
    %793 = vmax.xlane.f32.xlu0 %v774
    %v794 = vpop.xlane.xlu0 %793
    %795 = vmax.xlane.f32.xlu0 %v775
    %v796 = vpop.xlane.xlu0 %795
    %797 = vmax.xlane.f32.xlu0 %v776
    %v798 = vpop.xlane.xlu0 %797
    %799 = vmax.xlane.f32.xlu0 %v777
    %v800 = vpop.xlane.xlu0 %799
    %801 = vmax.xlane.f32.xlu0 %v778
    %v802 = vpop.xlane.xlu0 %801
    %803 = vmax.xlane.f32.xlu0 %v779
    %v804 = vpop.xlane.xlu0 %803
    %805 = vmax.xlane.f32.xlu0 %v780
    %v806 = vpop.xlane.xlu0 %805
    %807 = vmax.xlane.f32.xlu0 %v781
    %v808 = vpop.xlane.xlu0 %807
    %809 = vmax.xlane.f32.xlu0 %v782
    %v810 = vpop.xlane.xlu0 %809
    %811 = vmax.xlane.f32.xlu0 %v783
    %v812 = vpop.xlane.xlu0 %811
    %813 = vmax.xlane.f32.xlu0 %v784
    %v814 = vpop.xlane.xlu0 %813
    %815 = vmax.xlane.f32.xlu0 %v785
    %v816 = vpop.xlane.xlu0 %815
    %817 = vmax.xlane.f32.xlu0 %v786
    %v818 = vpop.xlane.xlu0 %817
    %v819 = vsub.f32 %v771, %v788
    %v820 = vsub.f32 %v772, %v790
    %v821 = vsub.f32 %v773, %v792
    %v822 = vsub.f32 %v774, %v794
    %v823 = vsub.f32 %v775, %v796
    %v824 = vsub.f32 %v776, %v798
    %v825 = vsub.f32 %v777, %v800
    %v826 = vsub.f32 %v778, %v802
    %v827 = vsub.f32 %v779, %v804
    %v828 = vsub.f32 %v780, %v806
    %v829 = vsub.f32 %v781, %v808
    %v830 = vsub.f32 %v782, %v810
    %v831 = vsub.f32 %v783, %v812
    %v832 = vsub.f32 %v784, %v814
    %v833 = vsub.f32 %v785, %v816
    %v834 = vsub.f32 %v786, %v818
    %v835 = vmul.f32 %v819, 1.442695
    %v836 = vpow.pop %v835
    %v837 = vmul.f32 %v820, 1.442695
    %v838 = vpow.pop %v837
    %v839 = vmul.f32 %v821, 1.442695
    %v840 = vpow.pop %v839
    %v841 = vmul.f32 %v822, 1.442695
    %v842 = vpow.pop %v841
    %v843 = vmul.f32 %v823, 1.442695
    %v844 = vpow.pop %v843
    %v845 = vmul.f32 %v824, 1.442695
    %v846 = vpow.pop %v845
    %v847 = vmul.f32 %v825, 1.442695
    %v848 = vpow.pop %v847
    %v849 = vmul.f32 %v826, 1.442695
    %v850 = vpow.pop %v849
    %v851 = vmul.f32 %v827, 1.442695
    %v852 = vpow.pop %v851
    %v853 = vmul.f32 %v828, 1.442695
    %v854 = vpow.pop %v853
    %v855 = vmul.f32 %v829, 1.442695
    %v856 = vpow.pop %v855
    %v857 = vmul.f32 %v830, 1.442695
    %v858 = vpow.pop %v857
    %v859 = vmul.f32 %v831, 1.442695
    %v860 = vpow.pop %v859
    %v861 = vmul.f32 %v832, 1.442695
    %v862 = vpow.pop %v861
    %v863 = vmul.f32 %v833, 1.442695
    %v864 = vpow.pop %v863
    %v865 = vmul.f32 %v834, 1.442695
    %v866 = vpow.pop %v865
    %867 = vadd.xlane.f32.xlu0 %v836
    %v868 = vpop.xlane.xlu0 %867
    %869 = vadd.xlane.f32.xlu0 %v838
    %v870 = vpop.xlane.xlu0 %869
    %871 = vadd.xlane.f32.xlu0 %v840
    %v872 = vpop.xlane.xlu0 %871
    %873 = vadd.xlane.f32.xlu0 %v842
    %v874 = vpop.xlane.xlu0 %873
    %875 = vadd.xlane.f32.xlu0 %v844
    %v876 = vpop.xlane.xlu0 %875
    %877 = vadd.xlane.f32.xlu0 %v846
    %v878 = vpop.xlane.xlu0 %877
    %879 = vadd.xlane.f32.xlu0 %v848
    %v880 = vpop.xlane.xlu0 %879
    %881 = vadd.xlane.f32.xlu0 %v850
    %v882 = vpop.xlane.xlu0 %881
    %883 = vadd.xlane.f32.xlu0 %v852
    %v884 = vpop.xlane.xlu0 %883
    %885 = vadd.xlane.f32.xlu0 %v854
    %v886 = vpop.xlane.xlu0 %885
    %887 = vadd.xlane.f32.xlu0 %v856
    %v888 = vpop.xlane.xlu0 %887
    %889 = vadd.xlane.f32.xlu0 %v858
    %v890 = vpop.xlane.xlu0 %889
    %891 = vadd.xlane.f32.xlu0 %v860
    %v892 = vpop.xlane.xlu0 %891
    %893 = vadd.xlane.f32.xlu0 %v862
    %v894 = vpop.xlane.xlu0 %893
    %895 = vadd.xlane.f32.xlu0 %v864
    %v896 = vpop.xlane.xlu0 %895
    %897 = vadd.xlane.f32.xlu0 %v866
    %v898 = vpop.xlane.xlu0 %897
    %v899 = vlog2.pop %v868
    %v900 = vmul.f32 %v899, 0.6931472
    %v901 = vlog2.pop %v870
    %v902 = vmul.f32 %v901, 0.6931472
    %v903 = vlog2.pop %v872
    %v904 = vmul.f32 %v903, 0.6931472
    %v905 = vlog2.pop %v874
    %v906 = vmul.f32 %v905, 0.6931472
    %v907 = vlog2.pop %v876
    %v908 = vmul.f32 %v907, 0.6931472
    %v909 = vlog2.pop %v878
    %v910 = vmul.f32 %v909, 0.6931472
    %v911 = vlog2.pop %v880
    %v912 = vmul.f32 %v911, 0.6931472
    %v913 = vlog2.pop %v882
    %v914 = vmul.f32 %v913, 0.6931472
    %v915 = vlog2.pop %v884
    %v916 = vmul.f32 %v915, 0.6931472
    %v917 = vlog2.pop %v886
    %v918 = vmul.f32 %v917, 0.6931472
    %v919 = vlog2.pop %v888
    %v920 = vmul.f32 %v919, 0.6931472
    %v921 = vlog2.pop %v890
    %v922 = vmul.f32 %v921, 0.6931472
    %v923 = vlog2.pop %v892
    %v924 = vmul.f32 %v923, 0.6931472
    %v925 = vlog2.pop %v894
    %v926 = vmul.f32 %v925, 0.6931472
    %v927 = vlog2.pop %v896
    %v928 = vmul.f32 %v927, 0.6931472
    %v929 = vlog2.pop %v898
    %v930 = vmul.f32 %v929, 0.6931472
    %v931 = vadd.f32 %v788, %v900
    %v932 = vadd.f32 %v790, %v902
    %v933 = vadd.f32 %v792, %v904
    %v934 = vadd.f32 %v794, %v906
    %v935 = vadd.f32 %v796, %v908
    %v936 = vadd.f32 %v798, %v910
    %v937 = vadd.f32 %v800, %v912
    %v938 = vadd.f32 %v802, %v914
    %v939 = vadd.f32 %v804, %v916
    %v940 = vadd.f32 %v806, %v918
    %v941 = vadd.f32 %v808, %v920
    %v942 = vadd.f32 %v810, %v922
    %v943 = vadd.f32 %v812, %v924
    %v944 = vadd.f32 %v814, %v926
    %v945 = vadd.f32 %v816, %v928
    %v946 = vadd.f32 %v818, %v930
    %v947 = vsub.f32 %v771, %v931
    %v948 = vsub.f32 %v772, %v932
    %v949 = vsub.f32 %v773, %v933
    %v950 = vsub.f32 %v774, %v934
    %v951 = vsub.f32 %v775, %v935
    %v952 = vsub.f32 %v776, %v936
    %v953 = vsub.f32 %v777, %v937
    %v954 = vsub.f32 %v778, %v938
    %v955 = vsub.f32 %v779, %v939
    %v956 = vsub.f32 %v780, %v940
    %v957 = vsub.f32 %v781, %v941
    %v958 = vsub.f32 %v782, %v942
    %v959 = vsub.f32 %v783, %v943
    %v960 = vsub.f32 %v784, %v944
    %v961 = vsub.f32 %v785, %v945
    %v962 = vsub.f32 %v786, %v946
    %v963 = vrcp.pop %v868
    %v964 = vrcp.pop %v870
    %v965 = vrcp.pop %v872
    %v966 = vrcp.pop %v874
    %v967 = vrcp.pop %v876
    %v968 = vrcp.pop %v878
    %v969 = vrcp.pop %v880
    %v970 = vrcp.pop %v882
    %v971 = vrcp.pop %v884
    %v972 = vrcp.pop %v886
    %v973 = vrcp.pop %v888
    %v974 = vrcp.pop %v890
    %v975 = vrcp.pop %v892
    %v976 = vrcp.pop %v894
    %v977 = vrcp.pop %v896
    %v978 = vrcp.pop %v898
    %v979 = vmul.f32 %v836, %v963
    %v980 = vmul.f32 %v838, %v964
    %v981 = vmul.f32 %v840, %v965
    %v982 = vmul.f32 %v842, %v966
    %v983 = vmul.f32 %v844, %v967
    %v984 = vmul.f32 %v846, %v968
    %v985 = vmul.f32 %v848, %v969
    %v986 = vmul.f32 %v850, %v970
    %v987 = vmul.f32 %v852, %v971
    %v988 = vmul.f32 %v854, %v972
    %v989 = vmul.f32 %v856, %v973
    %v990 = vmul.f32 %v858, %v974
    %v991 = vmul.f32 %v860, %v975
    %v992 = vmul.f32 %v862, %v976
    %v993 = vmul.f32 %v864, %v977
    %v994 = vmul.f32 %v866, %v978
    %v995 = vsub.f32 %v947, %v755
    %v996 = vsub.f32 %v948, %v756
    %v997 = vsub.f32 %v949, %v757
    %v998 = vsub.f32 %v950, %v758
    %v999 = vsub.f32 %v951, %v759
    %v1000 = vsub.f32 %v952, %v760
    %v1001 = vsub.f32 %v953, %v761
    %v1002 = vsub.f32 %v954, %v762
    %v1003 = vsub.f32 %v955, %v763
    %v1004 = vsub.f32 %v956, %v764
    %v1005 = vsub.f32 %v957, %v765
    %v1006 = vsub.f32 %v958, %v766
    %v1007 = vsub.f32 %v959, %v767
    %v1008 = vsub.f32 %v960, %v768
    %v1009 = vsub.f32 %v961, %v769
    %v1010 = vsub.f32 %v962, %v770
    %v1011 = vmul.f32 %v979, %v995
    %v1012 = vmul.f32 %v980, %v996
    %v1013 = vmul.f32 %v981, %v997
    %v1014 = vmul.f32 %v982, %v998
    %v1015 = vmul.f32 %v983, %v999
    %v1016 = vmul.f32 %v984, %v1000
    %v1017 = vmul.f32 %v985, %v1001
    %v1018 = vmul.f32 %v986, %v1002
    %v1019 = vmul.f32 %v987, %v1003
    %v1020 = vmul.f32 %v988, %v1004
    %v1021 = vmul.f32 %v989, %v1005
    %v1022 = vmul.f32 %v990, %v1006
    %v1023 = vmul.f32 %v991, %v1007
    %v1024 = vmul.f32 %v992, %v1008
    %v1025 = vmul.f32 %v993, %v1009
    %v1026 = vmul.f32 %v994, %v1010
    %v1027 = vsel %vm563, %v1011, 0.0
    %v1028 = vsel %vm564, %v1012, 0.0
    %v1029 = vsel %vm565, %v1013, 0.0
    %v1030 = vsel %vm566, %v1014, 0.0
    %v1031 = vsel %vm567, %v1015, 0.0
    %v1032 = vsel %vm568, %v1016, 0.0
    %v1033 = vsel %vm569, %v1017, 0.0
    %v1034 = vsel %vm570, %v1018, 0.0
    %v1035 = vsel %vm571, %v1019, 0.0
    %v1036 = vsel %vm572, %v1020, 0.0
    %v1037 = vsel %vm573, %v1021, 0.0
    %v1038 = vsel %vm574, %v1022, 0.0
    %v1039 = vsel %vm575, %v1023, 0.0
    %v1040 = vsel %vm576, %v1024, 0.0
    %v1041 = vsel %vm577, %v1025, 0.0
    %v1042 = vsel %vm578, %v1026, 0.0
    %v1043 = vadd.f32 %v1027, %v1028
    %v1044 = vadd.f32 %v1043, %v1029
    %v1045 = vadd.f32 %v1044, %v1030
    %v1046 = vadd.f32 %v1045, %v1031
    %v1047 = vadd.f32 %v1046, %v1032
    %v1048 = vadd.f32 %v1047, %v1033
    %v1049 = vadd.f32 %v1048, %v1034
    %v1050 = vadd.f32 %v1049, %v1035
    %v1051 = vadd.f32 %v1050, %v1036
    %v1052 = vadd.f32 %v1051, %v1037
    %v1053 = vadd.f32 %v1052, %v1038
    %v1054 = vadd.f32 %v1053, %v1039
    %v1055 = vadd.f32 %v1054, %v1040
    %v1056 = vadd.f32 %v1055, %v1041
    %v1057 = vadd.f32 %v1056, %v1042
    %v1058 = vadd.f32 %v1057, 0.0
    %1059 = vst [vmem:[#allocation2] sm:$0xff] %v1058
    // Predicated region
    $region22: #{tpu_custom_call.1} parent=1 // pred_check
      _
    $region23: #{tpu_custom_call.1} parent=1 // pred_check_branch
      %1061 = sbr.rel (0) target = $region25
    $region24: #{tpu_custom_call.1} parent=1 // pred_region
      %s1063 = ssub.s32 128, 128
      %1064 = vsyncadd [#allocation3], %s1063
      %s1066 = sshll.u32 [#allocation2], 4
      %s1067 = int_to_ptr.vmem [resolvable:$true] %s1066
      %1069 = dma.vmem_to_hbm [thread:$0]  %s1067, 128, %s5, [#allocation3]
    $region25: #{tpu_custom_call.1} parent=1 // pred_fallthru
      _
    // Predicated region
    $region26: #{tpu_custom_call.1} parent=1 // pred_check
      _
    $region27: #{tpu_custom_call.1} parent=1 // pred_check_branch
      %1071 = sbr.rel (0) target = $region29
    $region28: #{tpu_custom_call.1} parent=1 // pred_region
      %1072 = dma.done [#allocation3], 128
    $region29: #{tpu_custom_call.1} parent=1 // pred_fallthru
      _
    %1073 = vsyncpa [#allocation3], 1

</llo_original>
